<compile_context>
chip_gen: v7x
topology: tpu7x:2x2x1
jax: 0.10.0
libtpu: 0.0.40
codegen_flags: <defaults>
</compile_context>

<pallas_src>
import functools

import jax
import jax.numpy as jnp
from jax.experimental import pallas as pl
from jax.experimental.pallas import tpu as pltpu


def _mvp_kernel(x_ref, w1_ref, bias_ref, w2_ref, out_ref, *, V, S, O):
    """Fused forward for all V sub-models in one invocation.

    x_ref   : (B, I)               input activations (f32 or bf16)
    w1_ref  : (I, V*S)             layer-1 weights, variable-major columns
    bias_ref: (1, V*S + V*O)  f32  [b1 | b2] concatenated (single DMA)
    w2_ref  : (V, S, O)            layer-2 weights, per variable
    out_ref : (V, B, O)       f32  per-variable logits; (V*B, O) via reshape
    """
    VS = V * S
    # Layer 1: one wide MXU matmul covering all variables, f32 accumulation.
    h = jnp.tanh(
        jnp.dot(x_ref[...], w1_ref[...], preferred_element_type=jnp.float32)
        + bias_ref[:, :VS]
    )
    # Layer 2: statically unrolled per-variable matmuls (V tiny MXU pushes,
    # acceptable at this size).  Writing (V, B, O) lets the caller get the
    # torch.cat (V*B, O) layout with a free reshape — no post-kernel transpose.
    for v in range(V):
        h_v = h[:, v * S:(v + 1) * S].astype(w2_ref.dtype)
        logits_v = (
            jnp.dot(h_v, w2_ref[v], preferred_element_type=jnp.float32)
            + bias_ref[:, VS + v * O:VS + (v + 1) * O]
        )
        out_ref[v] = logits_v.astype(out_ref.dtype)


def pack_multivar_params(w1, b1, w2, b2, compute_dtype=jnp.float32):
    """One-time parameter packing. Call at parameter-load time, NOT per forward.

    w1: (V, I, S); b1: (V, 1, S); w2: (V, S, O); b2: (V, 1, O).
    compute_dtype: jnp.float32, or jnp.bfloat16 on v6e/v7x for MXU-native
    operands (accumulation stays f32 inside the kernel).
    """
    V, I, S = w1.shape
    O = w2.shape[-1]
    # Layer-1 weights: (V, I, S) -> (I, V*S), variable-major columns.
    w1_flat = jnp.transpose(w1, (1, 0, 2)).reshape(I, V * S).astype(compute_dtype)
    # Biases concatenated into one operand; kept f32 (added after f32 acc).
    bias = jnp.concatenate(
        [b1.reshape(1, V * S), b2.reshape(1, V * O)], axis=1
    ).astype(jnp.float32)
    # Layer-2 weights stay (V, S, O): no block-diagonal build needed.
    w2_p = w2.astype(compute_dtype)
    return w1_flat, bias, w2_p


def multivar_prob_model_fwd(x, w1_flat, bias, w2_p):
    """x: (B, I) + packed params -> logits (V*B, O), matching torch.cat(dim=0)."""
    B, I = x.shape
    V, S, O = w2_p.shape
    x = x.astype(w1_flat.dtype)  # single cheap cast (no-op for f32 path)

    itemsize = jnp.dtype(w1_flat.dtype).itemsize
    cost = pl.CostEstimate(
        flops=2 * B * I * V * S + 2 * B * V * S * O,
        transcendentals=B * V * S,
        bytes_accessed=(x.size * itemsize
                        + w1_flat.size * itemsize
                        + w2_p.size * itemsize
                        + bias.size * 4
                        + V * B * O * 4),
    )

    vmem = pl.BlockSpec(memory_space=pltpu.MemorySpace.VMEM)
    out = pl.pallas_call(
        functools.partial(_mvp_kernel, V=V, S=S, O=O),
        out_shape=jax.ShapeDtypeStruct((V, B, O), jnp.float32),
        in_specs=[vmem, vmem, vmem, vmem],
        out_specs=vmem,
        cost_estimate=cost,
    )(x, w1_flat, bias, w2_p)

    # (V, B, O) -> (V*B, O): pure reshape (variable-major rows), same values as
    # torch.cat(per-variable logits, 0).  No transpose HLO.
    return out.reshape(V * B, O)


def _reference(x, w1, b1, w2, b2):
    # Pure-JAX reference for correctness checking.
    h = jnp.tanh(jnp.einsum("bi,vis->vbs", x, w1) + b1)       # (V, B, S)
    logits = jnp.einsum("vbs,vso->vbo", h, w2) + b2           # (V, B, O)
    V, B, O = logits.shape
    return logits.reshape(V * B, O)


if __name__ == "__main__":
    # Module hyper-params: inout=(inputs, outputs), parameters=(variables, signals)
    inputs, outputs = 32, 16
    variables, signals = 4, 64
    batch = 8

    key = jax.random.PRNGKey(0)
    kx, k1, kb1, k2, kb2 = jax.random.split(key, 5)

    x = jax.random.normal(kx, (batch, inputs), dtype=jnp.float32)
    w1 = jax.random.normal(k1, (variables, inputs, signals), dtype=jnp.float32) * 0.1
    b1 = jax.random.normal(kb1, (variables, 1, signals), dtype=jnp.float32) * 0.01
    w2 = jax.random.normal(k2, (variables, signals, outputs), dtype=jnp.float32) * 0.1
    b2 = jax.random.normal(kb2, (variables, 1, outputs), dtype=jnp.float32) * 0.01

    # Packing hoisted out of the hot path: done once at parameter-load time.
    packed_f32 = pack_multivar_params(w1, b1, w2, b2, compute_dtype=jnp.float32)
    fwd = jax.jit(multivar_prob_model_fwd)

    logits = jax.block_until_ready(fwd(x, *packed_f32))
    ref = _reference(x, w1, b1, w2, b2)
    assert logits.shape == (variables * batch, outputs)
    assert jnp.allclose(logits, ref, atol=1e-5, rtol=1e-5)

    # bf16 operand path (recommended on v6e/v7x): MXU-native operands, f32 acc.
    packed_bf16 = pack_multivar_params(w1, b1, w2, b2, compute_dtype=jnp.bfloat16)
    logits_bf16 = jax.block_until_ready(fwd(x, *packed_bf16))
    assert logits_bf16.shape == (variables * batch, outputs)
    assert jnp.allclose(logits_bf16, ref, atol=1e-1, rtol=1e-1)

    print("KERNEL_OK")
</pallas_src>

<mosaic_0001>
module attributes {stable_mosaic.version = 11 : i64} {
  func.func @_mvp_kernel(%arg0: memref<8x32xf32, #tpu.memory_space<vmem>>, %arg1: memref<32x256xf32, #tpu.memory_space<vmem>>, %arg2: memref<1x320xf32, #tpu.memory_space<vmem>>, %arg3: memref<4x64x16xf32, #tpu.memory_space<vmem>>, %arg4: memref<4x8x16xf32, #tpu.memory_space<vmem>>) attributes {dimension_semantics = [], scalar_prefetch = 0 : i64, scratch_operands = 0 : i64, tpu.core_type = #tpu.core_type<tc>} {
    %c0 = arith.constant 0 : index
    %c0_0 = arith.constant 0 : index
    %0 = vector.load %arg0[%c0, %c0_0] : memref<8x32xf32, #tpu.memory_space<vmem>>, vector<8x32xf32>
    %c0_1 = arith.constant 0 : index
    %c0_2 = arith.constant 0 : index
    %1 = vector.load %arg1[%c0_1, %c0_2] : memref<32x256xf32, #tpu.memory_space<vmem>>, vector<32x256xf32>
    %cst = arith.constant dense<0.000000e+00> : vector<8x256xf32>
    %2 = tpu.matmul %0, %1, %cst {dimension_numbers = #tpu.dot_dimension_numbers<[1], [0], [0], [1], [0, 0, 1, 1], [], []>} : vector<8x32xf32>, vector<32x256xf32>, vector<8x256xf32> -> vector<8x256xf32>
    %c0_3 = arith.constant 0 : index
    %c0_4 = arith.constant 0 : index
    %3 = vector.load %arg2[%c0_3, %c0_4] : memref<1x320xf32, #tpu.memory_space<vmem>>, vector<1x256xf32>
    %4 = vector.broadcast %3 : vector<1x256xf32> to vector<8x256xf32>
    %5 = arith.addf %2, %4 : vector<8x256xf32>
    %6 = math.tanh %5 : vector<8x256xf32>
    %7 = vector.extract_strided_slice %6 {offsets = [0, 0], sizes = [8, 64], strides = [1, 1]} : vector<8x256xf32> to vector<8x64xf32>
    %c0_5 = arith.constant 0 : index
    %c0_6 = arith.constant 0 : index
    %c0_7 = arith.constant 0 : index
    %8 = vector.load %arg3[%c0_5, %c0_6, %c0_7] : memref<4x64x16xf32, #tpu.memory_space<vmem>>, vector<1x64x16xf32>
    %9 = vector.shape_cast %8 : vector<1x64x16xf32> to vector<64x16xf32>
    %cst_8 = arith.constant dense<0.000000e+00> : vector<8x16xf32>
    %10 = tpu.matmul %7, %9, %cst_8 {dimension_numbers = #tpu.dot_dimension_numbers<[1], [0], [0], [1], [0, 0, 1, 1], [], []>} : vector<8x64xf32>, vector<64x16xf32>, vector<8x16xf32> -> vector<8x16xf32>
    %c0_9 = arith.constant 0 : index
    %c256 = arith.constant 256 : index
    %11 = vector.load %arg2[%c0_9, %c256] : memref<1x320xf32, #tpu.memory_space<vmem>>, vector<1x16xf32>
    %12 = vector.broadcast %11 : vector<1x16xf32> to vector<8x16xf32>
    %13 = arith.addf %10, %12 : vector<8x16xf32>
    %c0_10 = arith.constant 0 : index
    %c0_11 = arith.constant 0 : index
    %c0_12 = arith.constant 0 : index
    %14 = vector.load %arg4[%c0_10, %c0_11, %c0_12] : memref<4x8x16xf32, #tpu.memory_space<vmem>>, vector<1x8x16xf32>
    %15 = vector.shape_cast %14 : vector<1x8x16xf32> to vector<8x16xf32>
    %16 = vector.shape_cast %13 : vector<8x16xf32> to vector<1x8x16xf32>
    tpu.vector_store %arg4[%c0_10, %c0_11, %c0_12], %16 {strides = array<i32>} : memref<4x8x16xf32, #tpu.memory_space<vmem>>, vector<1x8x16xf32>,
    %17 = vector.extract_strided_slice %6 {offsets = [0, 64], sizes = [8, 64], strides = [1, 1]} : vector<8x256xf32> to vector<8x64xf32>
    %c1 = arith.constant 1 : index
    %c0_13 = arith.constant 0 : index
    %c0_14 = arith.constant 0 : index
    %18 = vector.load %arg3[%c1, %c0_13, %c0_14] : memref<4x64x16xf32, #tpu.memory_space<vmem>>, vector<1x64x16xf32>
    %19 = vector.shape_cast %18 : vector<1x64x16xf32> to vector<64x16xf32>
    %cst_15 = arith.constant dense<0.000000e+00> : vector<8x16xf32>
    %20 = tpu.matmul %17, %19, %cst_15 {dimension_numbers = #tpu.dot_dimension_numbers<[1], [0], [0], [1], [0, 0, 1, 1], [], []>} : vector<8x64xf32>, vector<64x16xf32>, vector<8x16xf32> -> vector<8x16xf32>
    %c0_16 = arith.constant 0 : index
    %c272 = arith.constant 272 : index
    %21 = vector.load %arg2[%c0_16, %c272] : memref<1x320xf32, #tpu.memory_space<vmem>>, vector<1x16xf32>
    %22 = vector.broadcast %21 : vector<1x16xf32> to vector<8x16xf32>
    %23 = arith.addf %20, %22 : vector<8x16xf32>
    %c1_17 = arith.constant 1 : index
    %c0_18 = arith.constant 0 : index
    %c0_19 = arith.constant 0 : index
    %24 = vector.load %arg4[%c1_17, %c0_18, %c0_19] : memref<4x8x16xf32, #tpu.memory_space<vmem>>, vector<1x8x16xf32>
    %25 = vector.shape_cast %24 : vector<1x8x16xf32> to vector<8x16xf32>
    %26 = vector.shape_cast %23 : vector<8x16xf32> to vector<1x8x16xf32>
    tpu.vector_store %arg4[%c1_17, %c0_18, %c0_19], %26 {strides = array<i32>} : memref<4x8x16xf32, #tpu.memory_space<vmem>>, vector<1x8x16xf32>,
    %27 = vector.extract_strided_slice %6 {offsets = [0, 128], sizes = [8, 64], strides = [1, 1]} : vector<8x256xf32> to vector<8x64xf32>
    %c2 = arith.constant 2 : index
    %c0_20 = arith.constant 0 : index
    %c0_21 = arith.constant 0 : index
    %28 = vector.load %arg3[%c2, %c0_20, %c0_21] : memref<4x64x16xf32, #tpu.memory_space<vmem>>, vector<1x64x16xf32>
    %29 = vector.shape_cast %28 : vector<1x64x16xf32> to vector<64x16xf32>
    %cst_22 = arith.constant dense<0.000000e+00> : vector<8x16xf32>
    %30 = tpu.matmul %27, %29, %cst_22 {dimension_numbers = #tpu.dot_dimension_numbers<[1], [0], [0], [1], [0, 0, 1, 1], [], []>} : vector<8x64xf32>, vector<64x16xf32>, vector<8x16xf32> -> vector<8x16xf32>
    %c0_23 = arith.constant 0 : index
    %c288 = arith.constant 288 : index
    %31 = vector.load %arg2[%c0_23, %c288] : memref<1x320xf32, #tpu.memory_space<vmem>>, vector<1x16xf32>
    %32 = vector.broadcast %31 : vector<1x16xf32> to vector<8x16xf32>
    %33 = arith.addf %30, %32 : vector<8x16xf32>
    %c2_24 = arith.constant 2 : index
    %c0_25 = arith.constant 0 : index
    %c0_26 = arith.constant 0 : index
    %34 = vector.load %arg4[%c2_24, %c0_25, %c0_26] : memref<4x8x16xf32, #tpu.memory_space<vmem>>, vector<1x8x16xf32>
    %35 = vector.shape_cast %34 : vector<1x8x16xf32> to vector<8x16xf32>
    %36 = vector.shape_cast %33 : vector<8x16xf32> to vector<1x8x16xf32>
    tpu.vector_store %arg4[%c2_24, %c0_25, %c0_26], %36 {strides = array<i32>} : memref<4x8x16xf32, #tpu.memory_space<vmem>>, vector<1x8x16xf32>,
    %37 = vector.extract_strided_slice %6 {offsets = [0, 192], sizes = [8, 64], strides = [1, 1]} : vector<8x256xf32> to vector<8x64xf32>
    %c3 = arith.constant 3 : index
    %c0_27 = arith.constant 0 : index
    %c0_28 = arith.constant 0 : index
    %38 = vector.load %arg3[%c3, %c0_27, %c0_28] : memref<4x64x16xf32, #tpu.memory_space<vmem>>, vector<1x64x16xf32>
    %39 = vector.shape_cast %38 : vector<1x64x16xf32> to vector<64x16xf32>
    %cst_29 = arith.constant dense<0.000000e+00> : vector<8x16xf32>
    %40 = tpu.matmul %37, %39, %cst_29 {dimension_numbers = #tpu.dot_dimension_numbers<[1], [0], [0], [1], [0, 0, 1, 1], [], []>} : vector<8x64xf32>, vector<64x16xf32>, vector<8x16xf32> -> vector<8x16xf32>
    %c0_30 = arith.constant 0 : index
    %c304 = arith.constant 304 : index
    %41 = vector.load %arg2[%c0_30, %c304] : memref<1x320xf32, #tpu.memory_space<vmem>>, vector<1x16xf32>
    %42 = vector.broadcast %41 : vector<1x16xf32> to vector<8x16xf32>
    %43 = arith.addf %40, %42 : vector<8x16xf32>
    %c3_31 = arith.constant 3 : index
    %c0_32 = arith.constant 0 : index
    %c0_33 = arith.constant 0 : index
    %44 = vector.load %arg4[%c3_31, %c0_32, %c0_33] : memref<4x8x16xf32, #tpu.memory_space<vmem>>, vector<1x8x16xf32>
    %45 = vector.shape_cast %44 : vector<1x8x16xf32> to vector<8x16xf32>
    %46 = vector.shape_cast %43 : vector<8x16xf32> to vector<1x8x16xf32>
    tpu.vector_store %arg4[%c3_31, %c0_32, %c0_33], %46 {strides = array<i32>} : memref<4x8x16xf32, #tpu.memory_space<vmem>>, vector<1x8x16xf32>,
    return
  }
}

</mosaic_0001>

<llo_original>
// kernel: multivar_prob_model_fwd.1
$region0: #{multivar_prob_model_fwd.1}
  #allocation0 [shape = 'u32[]', space=smem, size = 0x4, offset = 0x4, fixed_abs, tag = 'smem constant byte address 0x4 - core index']
  #allocation1 [shape = 'u32[144,128]{1,0:T(1,128)}', space=vmem, size = 0x12000, scoped, tag = 'internal scratch']
  %s0 = inlined_call_operand.vmem [shape: f32[8,32], index: 0, kind: input, shape index: {}]
  %s1 = inlined_call_operand.vmem [shape: f32[32,256], index: 1, kind: input, shape index: {}]
  %s2 = inlined_call_operand.vmem [shape: f32[1,320], index: 2, kind: input, shape index: {}]
  %s3 = inlined_call_operand.vmem [shape: f32[4,64,16], index: 3, kind: input, shape index: {}]
  %s4 = inlined_call_operand.vmem [shape: f32[4,8,16], index: 4, kind: output, shape index: {}]
  %s5 = sld [smem:[#allocation0]]
  $region26: #{multivar_prob_model_fwd.1} parent=0
    _
  %s7 = ssub.s32 1, %s5
  %s8 = scalar_select 0, %s7, %s5
  // Predicated region
  $region2: #{multivar_prob_model_fwd.1} parent=0 // pred_check
    _
  $region3: #{multivar_prob_model_fwd.1} parent=0 // pred_check_branch
    %10 = sbr.rel (0) target = $region5
  $region4: #{multivar_prob_model_fwd.1} parent=0 // pred_region
    _
  $region5: #{multivar_prob_model_fwd.1} parent=0 // pred_fallthru
    _
  // Predicated region
  $region6: #{multivar_prob_model_fwd.1} parent=0 // pred_check
    _
  $region7: #{multivar_prob_model_fwd.1} parent=0 // pred_check_branch
    %12 = sbr.rel (0) target = $region9
  $region8: #{multivar_prob_model_fwd.1} parent=0 // pred_region
    _
  $region9: #{multivar_prob_model_fwd.1} parent=0 // pred_fallthru
    _
  // Predicated region
  $region10: #{multivar_prob_model_fwd.1} parent=0 // pred_check
    _
  $region11: #{multivar_prob_model_fwd.1} parent=0 // pred_check_branch
    %14 = sbr.rel (0) target = $region13
  $region12: #{multivar_prob_model_fwd.1} parent=0 // pred_region
    _
  $region13: #{multivar_prob_model_fwd.1} parent=0 // pred_fallthru
    _
  // Predicated region
  $region14: #{multivar_prob_model_fwd.1} parent=0 // pred_check
    _
  $region15: #{multivar_prob_model_fwd.1} parent=0 // pred_check_branch
    %16 = sbr.rel (0) target = $region17
  $region16: #{multivar_prob_model_fwd.1} parent=0 // pred_region
    _
  $region17: #{multivar_prob_model_fwd.1} parent=0 // pred_fallthru
    _
  %v17 = vld [vmem:[%s0] sm:$0xff]
  %v18 = vld [vmem:[%s1] sm:$0xff]
  %v19 = vld [vmem:[%s1 + $0x8] sm:$0xff]
  %v20 = vld [vmem:[%s1 + $0x10] sm:$0xff]
  %v21 = vld [vmem:[%s1 + $0x18] sm:$0xff]
  %v22 = vld [vmem:[%s1 + $0x20] sm:$0xff]
  %v23 = vld [vmem:[%s1 + $0x28] sm:$0xff]
  %v24 = vld [vmem:[%s1 + $0x30] sm:$0xff]
  %v25 = vld [vmem:[%s1 + $0x38] sm:$0xff]
  %v26 = vld [vmem:[%s2] sm:$0x3]
  %v28 = vlaneseq
  %v29 = vshrl.u32 %v28, 7
  %v30 = vsub.s32 0, %v29
  %v31 = vrot.slane %v26, %v30
  %v32 = vlaneseq
  %v33 = vshrl.u32 %v32, 7
  %v34 = vsub.s32 1, %v33
  %v35 = vrot.slane %v26, %v34
  %vm38 = vcmask 261120
  %v40 = vsel %vm38, %v17, 0
  %42 = vmatprep.subr.mxu0 %v19
  %43 = vmatpush1.msra.mxu0 %v18
  %44 = vmatprep.subr.mxu0 %v21
  %45 = vmatpush1.msra.mxu0 %v20
  %46 = vmatprep.subr.mxu0 %v23
  %47 = vmatpush1.msra.mxu0 %v22
  %48 = vmatprep.subr.mxu0 %v25
  %49 = vmatpush1.msra.mxu0 %v24
  %50 = vmatprep.subr.mxu0 0.0
  %51 = vmatpush1.msra.mxu0 0.0
  %52 = vmatprep.subr.mxu0 0.0
  %53 = vmatpush1.msra.mxu0 0.0
  %54 = vmatprep.subr.mxu0 0.0
  %55 = vmatpush1.msra.mxu0 0.0
  %56 = vmatprep.subr.mxu0 0.0
  %57 = vmatpush1.msra.mxu0 0.0
  %58 = vmatprep.subr.mxu0 0.0
  %59 = vmatpush1.msra.mxu0 0.0
  %60 = vmatprep.subr.mxu0 0.0
  %61 = vmatpush1.msra.mxu0 0.0
  %62 = vmatprep.subr.mxu0 0.0
  %63 = vmatpush1.msra.mxu0 0.0
  %64 = vmatprep.subr.mxu0 0.0
  %65 = vmatpush1.msra.mxu0 0.0
  %66 = vmatprep.subr.mxu0 0.0
  %67 = vmatpush1.msra.mxu0 0.0
  %68 = vmatprep.subr.mxu0 0.0
  %69 = vmatpush1.msra.mxu0 0.0
  %70 = vmatprep.subr.mxu0 0.0
  %71 = vmatpush1.msra.mxu0 0.0
  %72 = vmatprep.subr.mxu0 0.0
  %73 = vmatpush1.msra.mxu0 0.0
  %74 = vmatprep.subr.mxu0 0.0
  %75 = vmatpush1.msra.mxu0 0.0
  %76 = vmatprep.subr.mxu0 0.0
  %77 = vmatpush1.msra.mxu0 0.0
  %78 = vmatprep.subr.mxu0 0.0
  %79 = vmatpush1.msra.mxu0 0.0
  %80 = vmatprep.subr.mxu0 0.0
  %81 = vmatpush1.msra.mxu0 0.0
  %82 = vmatprep.subr.mxu0 0.0
  %83 = vmatpush1.msra.mxu0 0.0
  %84 = vmatprep.subr.mxu0 0.0
  %85 = vmatpush1.msra.mxu0 0.0
  %86 = vmatprep.subr.mxu0 0.0
  %87 = vmatpush1.msra.mxu0 0.0
  %88 = vmatprep.subr.mxu0 0.0
  %89 = vmatpush1.msra.mxu0 0.0
  %90 = vmatprep.subr.mxu0 0.0
  %91 = vmatpush1.msra.mxu0 0.0
  %92 = vmatprep.subr.mxu0 0.0
  %93 = vmatpush1.msra.mxu0 0.0
  %94 = vmatprep.subr.mxu0 0.0
  %95 = vmatpush1.msra.mxu0 0.0
  %96 = vmatprep.subr.mxu0 0.0
  %97 = vmatpush1.msra.mxu0 0.0
  %98 = vmatprep.subr.mxu0 0.0
  %99 = vmatpush1.msra.mxu0 0.0
  %100 = vmatprep.subr.mxu0 0.0
  %101 = vmatpush1.msra.mxu0 0.0
  %102 = vmatprep.subr.mxu0 0.0
  %103 = vmatpush1.msra.mxu0 0.0
  %104 = vmatprep.subr.mxu0 0.0
  %105 = vmatpush1.msra.mxu0 0.0
  %106 = vmatprep.mubr.f32.mxu0 0.0
  %107 = vmatmul.mubr.f32.gmra.mrb[0].mxu0 %v40
  %v108 = vpop.f32.mrb[0].mxu0
  %v109 = vadd.f32 %v31, %v108
  %v110 = vpop.f32.mrb[0].mxu0
  %v111 = vadd.f32 %v35, %v110
  %112 = vdwg.mxu0
  %v113 = vtanh.pop %v109
  %v114 = vtanh.pop %v111
  %v115 = vld [vmem:[%s3] sm:$0xff]
  %v116 = vld [vmem:[%s3 + $0x8] sm:$0xff]
  %v117 = vld [vmem:[%s3 + $0x10] sm:$0xff]
  %v118 = vld [vmem:[%s3 + $0x18] sm:$0xff]
  %v119 = vld [vmem:[%s3 + $0x20] sm:$0xff]
  %v120 = vld [vmem:[%s3 + $0x28] sm:$0xff]
  %v121 = vld [vmem:[%s3 + $0x30] sm:$0xff]
  %v122 = vld [vmem:[%s3 + $0x38] sm:$0xff]
  %v123 = vld [vmem:[%s2 + $0x2] sm:$0x1]
  %v125 = vlaneseq
  %v126 = vshrl.u32 %v125, 7
  %v127 = vsub.s32 0, %v126
  %v128 = vrot.slane %v123, %v127
  %vm130 = vcmask 523264
  %v132 = vsel %vm130, %v113, 0
  %134 = vmatprep.subr.mxu0 0.0
  %135 = vmatpush1.msra.mxu0 %v115
  %136 = vmatprep.subr.mxu0 0.0
  %137 = vmatpush1.msra.mxu0 %v116
  %138 = vmatprep.subr.mxu0 0.0
  %139 = vmatpush1.msra.mxu0 %v117
  %140 = vmatprep.subr.mxu0 0.0
  %141 = vmatpush1.msra.mxu0 %v118
  %142 = vmatprep.subr.mxu0 0.0
  %143 = vmatpush1.msra.mxu0 %v119
  %144 = vmatprep.subr.mxu0 0.0
  %145 = vmatpush1.msra.mxu0 %v120
  %146 = vmatprep.subr.mxu0 0.0
  %147 = vmatpush1.msra.mxu0 %v121
  %148 = vmatprep.subr.mxu0 0.0
  %149 = vmatpush1.msra.mxu0 %v122
  %150 = vmatprep.subr.mxu0 0.0
  %151 = vmatpush1.msra.mxu0 0.0
  %152 = vmatprep.subr.mxu0 0.0
  %153 = vmatpush1.msra.mxu0 0.0
  %154 = vmatprep.subr.mxu0 0.0
  %155 = vmatpush1.msra.mxu0 0.0
  %156 = vmatprep.subr.mxu0 0.0
  %157 = vmatpush1.msra.mxu0 0.0
  %158 = vmatprep.subr.mxu0 0.0
  %159 = vmatpush1.msra.mxu0 0.0
  %160 = vmatprep.subr.mxu0 0.0
  %161 = vmatpush1.msra.mxu0 0.0
  %162 = vmatprep.subr.mxu0 0.0
  %163 = vmatpush1.msra.mxu0 0.0
  %164 = vmatprep.subr.mxu0 0.0
  %165 = vmatpush1.msra.mxu0 0.0
  %166 = vmatprep.subr.mxu0 0.0
  %167 = vmatpush1.msra.mxu0 0.0
  %168 = vmatprep.subr.mxu0 0.0
  %169 = vmatpush1.msra.mxu0 0.0
  %170 = vmatprep.subr.mxu0 0.0
  %171 = vmatpush1.msra.mxu0 0.0
  %172 = vmatprep.subr.mxu0 0.0
  %173 = vmatpush1.msra.mxu0 0.0
  %174 = vmatprep.subr.mxu0 0.0
  %175 = vmatpush1.msra.mxu0 0.0
  %176 = vmatprep.subr.mxu0 0.0
  %177 = vmatpush1.msra.mxu0 0.0
  %178 = vmatprep.subr.mxu0 0.0
  %179 = vmatpush1.msra.mxu0 0.0
  %180 = vmatprep.subr.mxu0 0.0
  %181 = vmatpush1.msra.mxu0 0.0
  %182 = vmatprep.subr.mxu0 0.0
  %183 = vmatpush1.msra.mxu0 0.0
  %184 = vmatprep.subr.mxu0 0.0
  %185 = vmatpush1.msra.mxu0 0.0
  %186 = vmatprep.subr.mxu0 0.0
  %187 = vmatpush1.msra.mxu0 0.0
  %188 = vmatprep.subr.mxu0 0.0
  %189 = vmatpush1.msra.mxu0 0.0
  %190 = vmatprep.subr.mxu0 0.0
  %191 = vmatpush1.msra.mxu0 0.0
  %192 = vmatprep.subr.mxu0 0.0
  %193 = vmatpush1.msra.mxu0 0.0
  %194 = vmatprep.subr.mxu0 0.0
  %195 = vmatpush1.msra.mxu0 0.0
  %196 = vmatprep.subr.mxu0 0.0
  %197 = vmatpush1.msra.mxu0 0.0
  %198 = vmatprep.mubr.f32.mxu0 0.0
  %199 = vmatmul.mubr.f32.gmra.mrb[0].mxu0 %v132
  %v200 = vpop.f32.mrb[0].mxu0
  %v201 = vadd.f32 %v128, %v200
  %v202 = vpop.f32.mrb[0].mxu0
  %203 = vdwg.mxu0
  %vm204 = vcmask 130048
  %205 = vst.msk [vmem:[%s4] sm:$0xff] %vm204, %v201
  %s206 = scalar_lea.vmem %s3, 64
  %v207 = vld [vmem:[%s206] sm:$0xff]
  %v208 = vld [vmem:[%s206 + $0x8] sm:$0xff]
  %v209 = vld [vmem:[%s206 + $0x10] sm:$0xff]
  %v210 = vld [vmem:[%s206 + $0x18] sm:$0xff]
  %v211 = vld [vmem:[%s206 + $0x20] sm:$0xff]
  %v212 = vld [vmem:[%s206 + $0x28] sm:$0xff]
  %v213 = vld [vmem:[%s206 + $0x30] sm:$0xff]
  %v214 = vld [vmem:[%s206 + $0x38] sm:$0xff]
  %v215 = vld [vmem:[%s2 + $0x2] sm:$0x1]
  %v217 = vlaneseq
  %v218 = vshrl.u32 %v217, 7
  %v219 = vsub.s32 0, %v218
  %v220 = vrot.slane %v215, %v219
  %221 = vrot.lane.b32.xlu0 %v113, 64
  %v222 = vpop.permute.xlu0 %221
  %223 = vrot.lane.b32.xlu0 %v220, 112
  %v224 = vpop.permute.xlu0 %223
  %v226 = vsel %vm130, %v222, 0
  %228 = vmatprep.subr.mxu0 0.0
  %229 = vmatpush1.msra.mxu0 %v207
  %230 = vmatprep.subr.mxu0 0.0
  %231 = vmatpush1.msra.mxu0 %v208
  %232 = vmatprep.subr.mxu0 0.0
  %233 = vmatpush1.msra.mxu0 %v209
  %234 = vmatprep.subr.mxu0 0.0
  %235 = vmatpush1.msra.mxu0 %v210
  %236 = vmatprep.subr.mxu0 0.0
  %237 = vmatpush1.msra.mxu0 %v211
  %238 = vmatprep.subr.mxu0 0.0
  %239 = vmatpush1.msra.mxu0 %v212
  %240 = vmatprep.subr.mxu0 0.0
  %241 = vmatpush1.msra.mxu0 %v213
  %242 = vmatprep.subr.mxu0 0.0
  %243 = vmatpush1.msra.mxu0 %v214
  %244 = vmatprep.subr.mxu0 0.0
  %245 = vmatpush1.msra.mxu0 0.0
  %246 = vmatprep.subr.mxu0 0.0
  %247 = vmatpush1.msra.mxu0 0.0
  %248 = vmatprep.subr.mxu0 0.0
  %249 = vmatpush1.msra.mxu0 0.0
  %250 = vmatprep.subr.mxu0 0.0
  %251 = vmatpush1.msra.mxu0 0.0
  %252 = vmatprep.subr.mxu0 0.0
  %253 = vmatpush1.msra.mxu0 0.0
  %254 = vmatprep.subr.mxu0 0.0
  %255 = vmatpush1.msra.mxu0 0.0
  %256 = vmatprep.subr.mxu0 0.0
  %257 = vmatpush1.msra.mxu0 0.0
  %258 = vmatprep.subr.mxu0 0.0
  %259 = vmatpush1.msra.mxu0 0.0
  %260 = vmatprep.subr.mxu0 0.0
  %261 = vmatpush1.msra.mxu0 0.0
  %262 = vmatprep.subr.mxu0 0.0
  %263 = vmatpush1.msra.mxu0 0.0
  %264 = vmatprep.subr.mxu0 0.0
  %265 = vmatpush1.msra.mxu0 0.0
  %266 = vmatprep.subr.mxu0 0.0
  %267 = vmatpush1.msra.mxu0 0.0
  %268 = vmatprep.subr.mxu0 0.0
  %269 = vmatpush1.msra.mxu0 0.0
  %270 = vmatprep.subr.mxu0 0.0
  %271 = vmatpush1.msra.mxu0 0.0
  %272 = vmatprep.subr.mxu0 0.0
  %273 = vmatpush1.msra.mxu0 0.0
  %274 = vmatprep.subr.mxu0 0.0
  %275 = vmatpush1.msra.mxu0 0.0
  %276 = vmatprep.subr.mxu0 0.0
  %277 = vmatpush1.msra.mxu0 0.0
  %278 = vmatprep.subr.mxu0 0.0
  %279 = vmatpush1.msra.mxu0 0.0
  %280 = vmatprep.subr.mxu0 0.0
  %281 = vmatpush1.msra.mxu0 0.0
  %282 = vmatprep.subr.mxu0 0.0
  %283 = vmatpush1.msra.mxu0 0.0
  %284 = vmatprep.subr.mxu0 0.0
  %285 = vmatpush1.msra.mxu0 0.0
  %286 = vmatprep.subr.mxu0 0.0
  %287 = vmatpush1.msra.mxu0 0.0
  %288 = vmatprep.subr.mxu0 0.0
  %289 = vmatpush1.msra.mxu0 0.0
  %290 = vmatprep.subr.mxu0 0.0
  %291 = vmatpush1.msra.mxu0 0.0
  %292 = vmatprep.mubr.f32.mxu0 0.0
  %293 = vmatmul.mubr.f32.gmra.mrb[0].mxu0 %v226
  %v294 = vpop.f32.mrb[0].mxu0
  %v295 = vadd.f32 %v224, %v294
  %v296 = vpop.f32.mrb[0].mxu0
  %297 = vdwg.mxu0
  %s298 = scalar_lea.vmem %s4, 8
  %299 = vst.msk [vmem:[%s298] sm:$0xff] %vm204, %v295
  %s300 = scalar_lea.vmem %s3, 128
  %v301 = vld [vmem:[%s300] sm:$0xff]
  %v302 = vld [vmem:[%s300 + $0x8] sm:$0xff]
  %v303 = vld [vmem:[%s300 + $0x10] sm:$0xff]
  %v304 = vld [vmem:[%s300 + $0x18] sm:$0xff]
  %v305 = vld [vmem:[%s300 + $0x20] sm:$0xff]
  %v306 = vld [vmem:[%s300 + $0x28] sm:$0xff]
  %v307 = vld [vmem:[%s300 + $0x30] sm:$0xff]
  %v308 = vld [vmem:[%s300 + $0x38] sm:$0xff]
  %v309 = vld [vmem:[%s2 + $0x2] sm:$0x1]
  %v311 = vlaneseq
  %v312 = vshrl.u32 %v311, 7
  %v313 = vsub.s32 0, %v312
  %v314 = vrot.slane %v309, %v313
  %315 = vrot.lane.b32.xlu0 %v314, 96
  %v316 = vpop.permute.xlu0 %315
  %v319 = vsel %vm130, %v114, 0
  %321 = vmatprep.subr.mxu0 0.0
  %322 = vmatpush1.msra.mxu0 %v301
  %323 = vmatprep.subr.mxu0 0.0
  %324 = vmatpush1.msra.mxu0 %v302
  %325 = vmatprep.subr.mxu0 0.0
  %326 = vmatpush1.msra.mxu0 %v303
  %327 = vmatprep.subr.mxu0 0.0
  %328 = vmatpush1.msra.mxu0 %v304
  %329 = vmatprep.subr.mxu0 0.0
  %330 = vmatpush1.msra.mxu0 %v305
  %331 = vmatprep.subr.mxu0 0.0
  %332 = vmatpush1.msra.mxu0 %v306
  %333 = vmatprep.subr.mxu0 0.0
  %334 = vmatpush1.msra.mxu0 %v307
  %335 = vmatprep.subr.mxu0 0.0
  %336 = vmatpush1.msra.mxu0 %v308
  %337 = vmatprep.subr.mxu0 0.0
  %338 = vmatpush1.msra.mxu0 0.0
  %339 = vmatprep.subr.mxu0 0.0
  %340 = vmatpush1.msra.mxu0 0.0
  %341 = vmatprep.subr.mxu0 0.0
  %342 = vmatpush1.msra.mxu0 0.0
  %343 = vmatprep.subr.mxu0 0.0
  %344 = vmatpush1.msra.mxu0 0.0
  %345 = vmatprep.subr.mxu0 0.0
  %346 = vmatpush1.msra.mxu0 0.0
  %347 = vmatprep.subr.mxu0 0.0
  %348 = vmatpush1.msra.mxu0 0.0
  %349 = vmatprep.subr.mxu0 0.0
  %350 = vmatpush1.msra.mxu0 0.0
  %351 = vmatprep.subr.mxu0 0.0
  %352 = vmatpush1.msra.mxu0 0.0
  %353 = vmatprep.subr.mxu0 0.0
  %354 = vmatpush1.msra.mxu0 0.0
  %355 = vmatprep.subr.mxu0 0.0
  %356 = vmatpush1.msra.mxu0 0.0
  %357 = vmatprep.subr.mxu0 0.0
  %358 = vmatpush1.msra.mxu0 0.0
  %359 = vmatprep.subr.mxu0 0.0
  %360 = vmatpush1.msra.mxu0 0.0
  %361 = vmatprep.subr.mxu0 0.0
  %362 = vmatpush1.msra.mxu0 0.0
  %363 = vmatprep.subr.mxu0 0.0
  %364 = vmatpush1.msra.mxu0 0.0
  %365 = vmatprep.subr.mxu0 0.0
  %366 = vmatpush1.msra.mxu0 0.0
  %367 = vmatprep.subr.mxu0 0.0
  %368 = vmatpush1.msra.mxu0 0.0
  %369 = vmatprep.subr.mxu0 0.0
  %370 = vmatpush1.msra.mxu0 0.0
  %371 = vmatprep.subr.mxu0 0.0
  %372 = vmatpush1.msra.mxu0 0.0
  %373 = vmatprep.subr.mxu0 0.0
  %374 = vmatpush1.msra.mxu0 0.0
  %375 = vmatprep.subr.mxu0 0.0
  %376 = vmatpush1.msra.mxu0 0.0
  %377 = vmatprep.subr.mxu0 0.0
  %378 = vmatpush1.msra.mxu0 0.0
  %379 = vmatprep.subr.mxu0 0.0
  %380 = vmatpush1.msra.mxu0 0.0
  %381 = vmatprep.subr.mxu0 0.0
  %382 = vmatpush1.msra.mxu0 0.0
  %383 = vmatprep.subr.mxu0 0.0
  %384 = vmatpush1.msra.mxu0 0.0
  %385 = vmatprep.mubr.f32.mxu0 0.0
  %386 = vmatmul.mubr.f32.gmra.mrb[0].mxu0 %v319
  %v387 = vpop.f32.mrb[0].mxu0
  %v388 = vadd.f32 %v316, %v387
  %v389 = vpop.f32.mrb[0].mxu0
  %390 = vdwg.mxu0
  %s391 = scalar_lea.vmem %s4, 16
  %392 = vst.msk [vmem:[%s391] sm:$0xff] %vm204, %v388
  %s393 = scalar_lea.vmem %s3, 192
  %v394 = vld [vmem:[%s393] sm:$0xff]
  %v395 = vld [vmem:[%s393 + $0x8] sm:$0xff]
  %v396 = vld [vmem:[%s393 + $0x10] sm:$0xff]
  %v397 = vld [vmem:[%s393 + $0x18] sm:$0xff]
  %v398 = vld [vmem:[%s393 + $0x20] sm:$0xff]
  %v399 = vld [vmem:[%s393 + $0x28] sm:$0xff]
  %v400 = vld [vmem:[%s393 + $0x30] sm:$0xff]
  %v401 = vld [vmem:[%s393 + $0x38] sm:$0xff]
  %v402 = vld [vmem:[%s2 + $0x2] sm:$0x1]
  %v404 = vlaneseq
  %v405 = vshrl.u32 %v404, 7
  %v406 = vsub.s32 0, %v405
  %v407 = vrot.slane %v402, %v406
  %408 = vrot.lane.b32.xlu0 %v114, 64
  %v409 = vpop.permute.xlu0 %408
  %410 = vrot.lane.b32.xlu0 %v407, 80
  %v411 = vpop.permute.xlu0 %410
  %v413 = vsel %vm130, %v409, 0
  %415 = vmatprep.subr.mxu0 0.0
  %416 = vmatpush1.msra.mxu0 %v394
  %417 = vmatprep.subr.mxu0 0.0
  %418 = vmatpush1.msra.mxu0 %v395
  %419 = vmatprep.subr.mxu0 0.0
  %420 = vmatpush1.msra.mxu0 %v396
  %421 = vmatprep.subr.mxu0 0.0
  %422 = vmatpush1.msra.mxu0 %v397
  %423 = vmatprep.subr.mxu0 0.0
  %424 = vmatpush1.msra.mxu0 %v398
  %425 = vmatprep.subr.mxu0 0.0
  %426 = vmatpush1.msra.mxu0 %v399
  %427 = vmatprep.subr.mxu0 0.0
  %428 = vmatpush1.msra.mxu0 %v400
  %429 = vmatprep.subr.mxu0 0.0
  %430 = vmatpush1.msra.mxu0 %v401
  %431 = vmatprep.subr.mxu0 0.0
  %432 = vmatpush1.msra.mxu0 0.0
  %433 = vmatprep.subr.mxu0 0.0
  %434 = vmatpush1.msra.mxu0 0.0
  %435 = vmatprep.subr.mxu0 0.0
  %436 = vmatpush1.msra.mxu0 0.0
  %437 = vmatprep.subr.mxu0 0.0
  %438 = vmatpush1.msra.mxu0 0.0
  %439 = vmatprep.subr.mxu0 0.0
  %440 = vmatpush1.msra.mxu0 0.0
  %441 = vmatprep.subr.mxu0 0.0
  %442 = vmatpush1.msra.mxu0 0.0
  %443 = vmatprep.subr.mxu0 0.0
  %444 = vmatpush1.msra.mxu0 0.0
  %445 = vmatprep.subr.mxu0 0.0
  %446 = vmatpush1.msra.mxu0 0.0
  %447 = vmatprep.subr.mxu0 0.0
  %448 = vmatpush1.msra.mxu0 0.0
  %449 = vmatprep.subr.mxu0 0.0
  %450 = vmatpush1.msra.mxu0 0.0
  %451 = vmatprep.subr.mxu0 0.0
  %452 = vmatpush1.msra.mxu0 0.0
  %453 = vmatprep.subr.mxu0 0.0
  %454 = vmatpush1.msra.mxu0 0.0
  %455 = vmatprep.subr.mxu0 0.0
  %456 = vmatpush1.msra.mxu0 0.0
  %457 = vmatprep.subr.mxu0 0.0
  %458 = vmatpush1.msra.mxu0 0.0
  %459 = vmatprep.subr.mxu0 0.0
  %460 = vmatpush1.msra.mxu0 0.0
  %461 = vmatprep.subr.mxu0 0.0
  %462 = vmatpush1.msra.mxu0 0.0
  %463 = vmatprep.subr.mxu0 0.0
  %464 = vmatpush1.msra.mxu0 0.0
  %465 = vmatprep.subr.mxu0 0.0
  %466 = vmatpush1.msra.mxu0 0.0
  %467 = vmatprep.subr.mxu0 0.0
  %468 = vmatpush1.msra.mxu0 0.0
  %469 = vmatprep.subr.mxu0 0.0
  %470 = vmatpush1.msra.mxu0 0.0
  %471 = vmatprep.subr.mxu0 0.0
  %472 = vmatpush1.msra.mxu0 0.0
  %473 = vmatprep.subr.mxu0 0.0
  %474 = vmatpush1.msra.mxu0 0.0
  %475 = vmatprep.subr.mxu0 0.0
  %476 = vmatpush1.msra.mxu0 0.0
  %477 = vmatprep.subr.mxu0 0.0
  %478 = vmatpush1.msra.mxu0 0.0
  %479 = vmatprep.mubr.f32.mxu0 0.0
  %480 = vmatmul.mubr.f32.gmra.mrb[0].mxu0 %v413
  %v481 = vpop.f32.mrb[0].mxu0
  %v482 = vadd.f32 %v411, %v481
  %v483 = vpop.f32.mrb[0].mxu0
  %484 = vdwg.mxu0
  %s485 = scalar_lea.vmem %s4, 24
  %486 = vst.msk [vmem:[%s485] sm:$0xff] %vm204, %v482
  // Predicated region
  $region18: #{multivar_prob_model_fwd.1} parent=0 // pred_check
    _
  $region19: #{multivar_prob_model_fwd.1} parent=0 // pred_check_branch
    %488 = sbr.rel (0) target = $region21
  $region20: #{multivar_prob_model_fwd.1} parent=0 // pred_region
    _
  $region21: #{multivar_prob_model_fwd.1} parent=0 // pred_fallthru
    _
  // Predicated region
  $region22: #{multivar_prob_model_fwd.1} parent=0 // pred_check
    _
  $region23: #{multivar_prob_model_fwd.1} parent=0 // pred_check_branch
    %490 = sbr.rel (0) target = $region25
  $region24: #{multivar_prob_model_fwd.1} parent=0 // pred_region
    _
  $region25: #{multivar_prob_model_fwd.1} parent=0 // pred_fallthru
    _

</llo_original>
